<compile_context>
chip_gen: v6e
topology: v6e:2x2x1
jax: 0.10.0
libtpu: 0.0.40
codegen_flags: <defaults>
</compile_context>

<pallas_src>
import functools

import jax
import jax.numpy as jnp
from jax.experimental import pallas as pl
from jax.experimental.pallas import tpu as pltpu


def _round_up(x, m):
    return -(-x // m) * m


# ----------------------------------------------------------------------------
# Fused kernel: 3x3 stem conv (single im2col dot) + bias + ReLU + fused
# [out | aux] 1x1 heads, channel-major.
#
#   xc_ref   : (Cp, Mt)       bf16  current band of the flattened padded input
#   xn_ref   : (Cp, Mt)       bf16  next band (halo source)
#   wstem_ref: (hidden, 9*Cp) bf16  stem weights, K ordered as (dy, dx, c)
#   bstem_ref: (hidden, 1)    f32
#   whead_ref: (Npad, hidden) bf16  [out | aux] rows, zero-padded to Npad
#   bhead_ref: (Npad, 1)      f32
#   o_ref    : (Npad, Mt)     bf16  lane-dense logits tile (channels on sublanes)
# ----------------------------------------------------------------------------
def _fused_stem_heads_kernel(xc_ref, xn_ref, wstem_ref, bstem_ref,
                             whead_ref, bhead_ref, o_ref, *, Wp, halo):
    mt = xc_ref.shape[-1]

    # current band + halo prefix of the next band -> (Cp, Mt + halo).
    slab = jnp.concatenate([xc_ref[...], xn_ref[...][:, :halo]], axis=-1)

    # In-register im2col: 9 shifted views (lane offsets dy*Wp+dx), sublane-
    # concatenated (each piece is Cp rows, Cp % 8 == 0 -> aligned concat).
    taps = []
    for dy in range(3):
        for dx in range(3):
            off = dy * Wp + dx
            taps.append(slab[:, off:off + mt])
    lhs = jnp.concatenate(taps, axis=0)                          # (9*Cp, Mt) bf16

    # Single MXU dot for the whole 3x3 stem, f32 accumulation.
    feat = jnp.dot(wstem_ref[...], lhs,
                   preferred_element_type=jnp.float32)           # (hidden, Mt)
    feat = jnp.maximum(feat + bstem_ref[...], 0.0)               # bias + ReLU (VPU)

    # Fused [out | aux] heads: (Npad, hidden) @ (hidden, Mt).
    logits = jnp.dot(whead_ref[...], feat.astype(whead_ref.dtype),
                     preferred_element_type=jnp.float32) + bhead_ref[...]

    # bf16 store (halves HBM writeback); wrapper upcasts the useful slice to f32.
    o_ref[...] = logits.astype(o_ref.dtype)


def fused_stem_heads(x_flat, wstem_t, bstem, whead_t, bhead, *, Wp, Mt, T, halo):
    """x_flat: (N, Cp, Lp) bf16, channel-major flattened padded image.

    Returns (N, Npad, T*Mt) bf16 logits (channels on sublanes, wide pixels on lanes).
    """
    n, cp, _ = x_flat.shape
    hidden, k9 = wstem_t.shape
    npad = whead_t.shape[0]
    lout = T * Mt

    kernel = functools.partial(_fused_stem_heads_kernel, Wp=Wp, halo=halo)

    flops = int(2 * n * lout * (k9 * hidden + hidden * npad))
    bytes_accessed = int(
        2 * n * T * Mt * cp * 2                 # input band + halo band (bf16)
        + n * lout * npad * 2                   # bf16 logits writeback
        + wstem_t.size * 2 + whead_t.size * 2 + bstem.size * 4 + bhead.size * 4)

    return pl.pallas_call(
        kernel,
        out_shape=jax.ShapeDtypeStruct((n, npad, lout), jnp.bfloat16),
        grid_spec=pltpu.PrefetchScalarGridSpec(
            num_scalar_prefetch=0,
            grid=(n, T),
            in_specs=[
                # current pixel band
                pl.BlockSpec((None, cp, Mt), lambda b, t: (b, 0, t)),
                # next pixel band (halo source); the flat axis is padded so block
                # t+1 always exists.
                pl.BlockSpec((None, cp, Mt), lambda b, t: (b, 0, t + 1)),
                # weights / biases: constant index maps -> resident, DMA'd once.
                pl.BlockSpec((hidden, k9), lambda b, t: (0, 0)),
                pl.BlockSpec((hidden, 1), lambda b, t: (0, 0)),
                pl.BlockSpec((npad, hidden), lambda b, t: (0, 0)),
                pl.BlockSpec((npad, 1), lambda b, t: (0, 0)),
            ],
            out_specs=pl.BlockSpec((None, npad, Mt), lambda b, t: (b, 0, t)),
        ),
        compiler_params=pltpu.CompilerParams(
            dimension_semantics=("parallel", "parallel"),
            # Explicit limit so the same tile plan compiles on v7x (64 MiB VMEM);
            # per-step footprint here is ~1 MiB.
            vmem_limit_bytes=32 * 1024 * 1024,
        ),
        cost_estimate=pl.CostEstimate(
            flops=flops, transcendentals=0, bytes_accessed=bytes_accessed),
    )(x_flat, x_flat, wstem_t, bstem, whead_t, bhead)


# ----------------------------------------------------------------------------
# Synthetic "model": stem conv + two classification heads -> tuple (out, aux)
# ----------------------------------------------------------------------------
def make_params(key, c_in, hidden, num_classes):
    k = jax.random.split(key, 6)
    scale = 0.1
    return {
        # PyTorch conv weight layout: (out, in, kh, kw)
        "stem_w": scale * jax.random.normal(k[0], (hidden, c_in, 3, 3), jnp.float32),
        "stem_b": scale * jax.random.normal(k[1], (hidden,), jnp.float32),
        "out_w": scale * jax.random.normal(k[2], (num_classes, hidden, 1, 1), jnp.float32),
        "out_b": scale * jax.random.normal(k[3], (num_classes,), jnp.float32),
        "aux_w": scale * jax.random.normal(k[4], (num_classes, hidden, 1, 1), jnp.float32),
        "aux_b": scale * jax.random.normal(k[5], (num_classes,), jnp.float32),
    }


def model_forward(params, x_nchw):
    """Returns tuple (out, aux), both NCHW f32 logits, same H/W as input."""
    n, c, h, w = x_nchw.shape
    hidden = params["stem_w"].shape[0]
    nc = params["out_w"].shape[0]

    wp = w + 2                                   # one halo column each side
    cp = _round_up(c, 8)                         # sublane-aligned channel pad
    halo = _round_up(2 * wp + 2, 128)            # lanes of next band the taps need
    total_wide = h * wp                          # wide output pixels per batch elem

    # Tile picker: lane tile is a multiple of 128, near 2048, >= halo.
    target = 2048
    ntiles = max(1, -(-total_wide // target))
    mt = _round_up(-(-total_wide // ntiles), 128)
    mt = max(mt, halo)
    T = -(-total_wide // mt)
    lp_pad = (T + 1) * mt                        # flat length incl. the extra halo band

    # Input prep (channel-major, no transpose needed from NCHW):
    #  pad channels to Cp, pad 1 halo row/col each side, flatten padded rows,
    #  zero-pad the flat axis so block index T exists.
    x_pad = jnp.pad(x_nchw, ((0, 0), (0, cp - c), (1, 1), (1, 1)))   # (N, Cp, H+2, Wp)
    x_flat = x_pad.reshape(n, cp, (h + 2) * wp)
    x_flat = jnp.pad(x_flat, ((0, 0), (0, 0), (0, lp_pad - (h + 2) * wp)))
    x_flat = x_flat.astype(jnp.bfloat16)

    # Stem weights: (hidden, C, 3, 3) -> (hidden, dy, dx, Cp) -> (hidden, 9*Cp)
    # so the K ordering matches the kernel's (dy, dx, c) tap concatenation.
    wstem = jnp.transpose(params["stem_w"], (0, 2, 3, 1))            # (hidden, 3, 3, C)
    wstem = jnp.pad(wstem, ((0, 0), (0, 0), (0, 0), (0, cp - c)))
    wstem_t = wstem.reshape(hidden, 9 * cp).astype(jnp.bfloat16)
    bstem = params["stem_b"].reshape(hidden, 1).astype(jnp.float32)

    # Fused [out | aux] heads, channel-major, padded only to a sublane multiple.
    npad = _round_up(2 * nc, 8)
    w_out = params["out_w"][:, :, 0, 0]                              # (nc, hidden)
    w_aux = params["aux_w"][:, :, 0, 0]
    whead = jnp.zeros((npad, hidden), jnp.float32)
    whead = whead.at[:nc].set(w_out).at[nc:2 * nc].set(w_aux)
    whead_t = whead.astype(jnp.bfloat16)
    bhead = jnp.zeros((npad, 1), jnp.float32)
    bhead = bhead.at[:nc, 0].set(params["out_b"]).at[nc:2 * nc, 0].set(params["aux_b"])

    wide = fused_stem_heads(x_flat, wstem_t, bstem, whead_t, bhead,
                            Wp=wp, Mt=mt, T=T, halo=halo)            # (N, Npad, T*Mt) bf16

    # NCHW extraction is now just slicing (no transposes): drop the flat tail,
    # un-flatten to (H, Wp), drop the 2 garbage columns, split out/aux channels.
    wide = wide[:, :, :total_wide].reshape(n, npad, h, wp)
    out_nchw = wide[:, :nc, :, :w].astype(jnp.float32)
    aux_nchw = wide[:, nc:2 * nc, :, :w].astype(jnp.float32)
    return (out_nchw, aux_nchw)


def tuple_to_list_dict(out_tuple, image_size):
    # mirrors the PyTorch helper exactly
    _ = len(out_tuple) // image_size
    out_dict = {}
    out_dict["out"] = out_tuple[0]
    out_dict["aux"] = out_tuple[1]
    return out_dict


def detect_wrapper_forward(params, inp):
    """DetectWrapper.forward: model(inp) tuple -> {'out': ..., 'aux': ...}."""
    outs = model_forward(params, inp)
    results = tuple_to_list_dict(outs, inp.shape[0])
    return results


# ----------------------------------------------------------------------------
# Pure-JAX f32 reference of the same synthetic model (for a numerical check).
# ----------------------------------------------------------------------------
def reference_forward(params, x_nchw):
    hi = jax.lax.Precision.HIGHEST
    dn = ("NCHW", "OIHW", "NCHW")
    stem = jax.lax.conv_general_dilated(x_nchw, params["stem_w"], (1, 1), "SAME",
                                        dimension_numbers=dn, precision=hi)
    feat = jnp.maximum(stem + params["stem_b"][None, :, None, None], 0.0)
    out = jax.lax.conv_general_dilated(feat, params["out_w"], (1, 1), "SAME",
                                       dimension_numbers=dn, precision=hi)
    out = out + params["out_b"][None, :, None, None]
    aux = jax.lax.conv_general_dilated(feat, params["aux_w"], (1, 1), "SAME",
                                       dimension_numbers=dn, precision=hi)
    aux = aux + params["aux_b"][None, :, None, None]
    return out, aux


if __name__ == "__main__":
    key = jax.random.PRNGKey(0)
    k_inp, k_par = jax.random.split(key)

    # Small shapes consistent with the module (NCHW image batch).
    N, C, H, W = 2, 4, 16, 16
    hidden, num_classes = 32, 21

    x = jax.random.normal(k_inp, (N, C, H, W), jnp.float32)
    params = make_params(k_par, C, hidden, num_classes)

    results = jax.jit(detect_wrapper_forward)(params, x)
    jax.block_until_ready(results)

    assert set(results.keys()) == {"out", "aux"}
    assert results["out"].shape == (N, num_classes, H, W)
    assert results["aux"].shape == (N, num_classes, H, W)
    assert results["out"].dtype == jnp.float32

    ref_out, ref_aux = reference_forward(params, x)
    assert bool(jnp.allclose(results["out"], ref_out, atol=5e-2, rtol=5e-2))
    assert bool(jnp.allclose(results["aux"], ref_aux, atol=5e-2, rtol=5e-2))

    print("KERNEL_OK")
</pallas_src>

<mosaic_0001>
module attributes {stable_mosaic.version = 11 : i64} {
  func.func @_fused_stem_heads_kernel(%arg0: i32, %arg1: i32, %arg2: memref<1x8x384xbf16, #tpu.memory_space<vmem>>, %arg3: memref<1x8x384xbf16, #tpu.memory_space<vmem>>, %arg4: memref<32x72xbf16, #tpu.memory_space<vmem>>, %arg5: memref<32x1xf32, #tpu.memory_space<vmem>>, %arg6: memref<48x32xbf16, #tpu.memory_space<vmem>>, %arg7: memref<48x1xf32, #tpu.memory_space<vmem>>, %arg8: memref<1x48x384xbf16, #tpu.memory_space<vmem>>) attributes {dimension_semantics = [#tpu.dimension_semantics<parallel>, #tpu.dimension_semantics<parallel>], iteration_bounds = array<i64: 2, 1>, scalar_prefetch = 0 : i64, scratch_operands = 0 : i64, tpu.core_type = #tpu.core_type<tc>, window_params = [{transform_indices = @transform_0, window_bounds = array<i64: 1, 8, 384>}, {transform_indices = @transform_1, window_bounds = array<i64: 1, 8, 384>}, {pipeline_mode = #tpu.pipeline_mode<synchronous>, transform_indices = @transform_2, window_bounds = array<i64: 32, 72>}, {pipeline_mode = #tpu.pipeline_mode<synchronous>, transform_indices = @transform_3, window_bounds = array<i64: 32, 1>}, {pipeline_mode = #tpu.pipeline_mode<synchronous>, transform_indices = @transform_4, window_bounds = array<i64: 48, 32>}, {pipeline_mode = #tpu.pipeline_mode<synchronous>, transform_indices = @transform_5, window_bounds = array<i64: 48, 1>}, {transform_indices = @transform_6, window_bounds = array<i64: 1, 48, 384>}]} {
    %c0 = arith.constant 0 : index
    %c0_0 = arith.constant 0 : index
    %c0_1 = arith.constant 0 : index
    %0 = vector.load %arg2[%c0, %c0_0, %c0_1] : memref<1x8x384xbf16, #tpu.memory_space<vmem>>, vector<1x8x384xbf16>
    %1 = vector.shape_cast %0 : vector<1x8x384xbf16> to vector<8x384xbf16>
    %c0_2 = arith.constant 0 : index
    %c0_3 = arith.constant 0 : index
    %c0_4 = arith.constant 0 : index
    %2 = vector.load %arg3[%c0_2, %c0_3, %c0_4] : memref<1x8x384xbf16, #tpu.memory_space<vmem>>, vector<1x8x384xbf16>
    %3 = vector.shape_cast %2 : vector<1x8x384xbf16> to vector<8x384xbf16>
    %4 = vector.extract_strided_slice %3 {offsets = [0, 0], sizes = [8, 128], strides = [1, 1]} : vector<8x384xbf16> to vector<8x128xbf16>
    %5 = tpu.concatenate %1, %4 in 1 : vector<8x384xbf16>, vector<8x128xbf16> -> vector<8x512xbf16>
    %6 = vector.extract_strided_slice %5 {offsets = [0, 0], sizes = [8, 384], strides = [1, 1]} : vector<8x512xbf16> to vector<8x384xbf16>
    %7 = vector.extract_strided_slice %5 {offsets = [0, 1], sizes = [8, 384], strides = [1, 1]} : vector<8x512xbf16> to vector<8x384xbf16>
    %8 = vector.extract_strided_slice %5 {offsets = [0, 2], sizes = [8, 384], strides = [1, 1]} : vector<8x512xbf16> to vector<8x384xbf16>
    %9 = vector.extract_strided_slice %5 {offsets = [0, 18], sizes = [8, 384], strides = [1, 1]} : vector<8x512xbf16> to vector<8x384xbf16>
    %10 = vector.extract_strided_slice %5 {offsets = [0, 19], sizes = [8, 384], strides = [1, 1]} : vector<8x512xbf16> to vector<8x384xbf16>
    %11 = vector.extract_strided_slice %5 {offsets = [0, 20], sizes = [8, 384], strides = [1, 1]} : vector<8x512xbf16> to vector<8x384xbf16>
    %12 = vector.extract_strided_slice %5 {offsets = [0, 36], sizes = [8, 384], strides = [1, 1]} : vector<8x512xbf16> to vector<8x384xbf16>
    %13 = vector.extract_strided_slice %5 {offsets = [0, 37], sizes = [8, 384], strides = [1, 1]} : vector<8x512xbf16> to vector<8x384xbf16>
    %14 = vector.extract_strided_slice %5 {offsets = [0, 38], sizes = [8, 384], strides = [1, 1]} : vector<8x512xbf16> to vector<8x384xbf16>
    %15 = tpu.concatenate %6, %7, %8, %9, %10, %11, %12, %13, %14 in 0 : vector<8x384xbf16>, vector<8x384xbf16>, vector<8x384xbf16>, vector<8x384xbf16>, vector<8x384xbf16>, vector<8x384xbf16>, vector<8x384xbf16>, vector<8x384xbf16>, vector<8x384xbf16> -> vector<72x384xbf16>
    %c0_5 = arith.constant 0 : index
    %c0_6 = arith.constant 0 : index
    %16 = vector.load %arg4[%c0_5, %c0_6] : memref<32x72xbf16, #tpu.memory_space<vmem>>, vector<32x72xbf16>
    %cst = arith.constant dense<0.000000e+00> : vector<32x384xf32>
    %17 = tpu.matmul %16, %15, %cst {dimension_numbers = #tpu.dot_dimension_numbers<[1], [0], [0], [1], [0, 0, 1, 1], [], []>} : vector<32x72xbf16>, vector<72x384xbf16>, vector<32x384xf32> -> vector<32x384xf32>
    %c0_7 = arith.constant 0 : index
    %c0_8 = arith.constant 0 : index
    %18 = vector.load %arg5[%c0_7, %c0_8] : memref<32x1xf32, #tpu.memory_space<vmem>>, vector<32x1xf32>
    %19 = vector.broadcast %18 : vector<32x1xf32> to vector<32x384xf32>
    %20 = arith.addf %17, %19 : vector<32x384xf32>
    %cst_9 = arith.constant 0.000000e+00 : f32
    %21 = vector.broadcast %cst_9 : f32 to vector<32x384xf32>
    %22 = arith.maximumf %20, %21 : vector<32x384xf32>
    %c0_10 = arith.constant 0 : index
    %c0_11 = arith.constant 0 : index
    %23 = vector.load %arg6[%c0_10, %c0_11] : memref<48x32xbf16, #tpu.memory_space<vmem>>, vector<48x32xbf16>
    %24 = arith.truncf %22 : vector<32x384xf32> to vector<32x384xbf16>
    %cst_12 = arith.constant dense<0.000000e+00> : vector<48x384xf32>
    %25 = tpu.matmul %23, %24, %cst_12 {dimension_numbers = #tpu.dot_dimension_numbers<[1], [0], [0], [1], [0, 0, 1, 1], [], []>} : vector<48x32xbf16>, vector<32x384xbf16>, vector<48x384xf32> -> vector<48x384xf32>
    %c0_13 = arith.constant 0 : index
    %c0_14 = arith.constant 0 : index
    %26 = vector.load %arg7[%c0_13, %c0_14] : memref<48x1xf32, #tpu.memory_space<vmem>>, vector<48x1xf32>
    %27 = vector.broadcast %26 : vector<48x1xf32> to vector<48x384xf32>
    %28 = arith.addf %25, %27 : vector<48x384xf32>
    %29 = arith.truncf %28 : vector<48x384xf32> to vector<48x384xbf16>
    %c0_15 = arith.constant 0 : index
    %c0_16 = arith.constant 0 : index
    %c0_17 = arith.constant 0 : index
    %30 = vector.load %arg8[%c0_15, %c0_16, %c0_17] : memref<1x48x384xbf16, #tpu.memory_space<vmem>>, vector<1x48x384xbf16>
    %31 = vector.shape_cast %30 : vector<1x48x384xbf16> to vector<48x384xbf16>
    %32 = vector.shape_cast %29 : vector<48x384xbf16> to vector<1x48x384xbf16>
    tpu.vector_store %arg8[%c0_15, %c0_16, %c0_17], %32 {strides = array<i32>} : memref<1x48x384xbf16, #tpu.memory_space<vmem>>, vector<1x48x384xbf16>,
    return
  }
  func.func @transform_0(%arg0: i32, %arg1: i32) -> (i32, i32, i32) {
    %c0_i32 = arith.constant 0 : i32
    %c0_i32_0 = arith.constant 0 : i32
    return %arg0, %c0_i32, %arg1 : i32, i32, i32
  }
  func.func @transform_1(%arg0: i32, %arg1: i32) -> (i32, i32, i32) {
    %c1_i32 = arith.constant 1 : i32
    %0 = arith.addi %arg1, %c1_i32 : i32
    %c0_i32 = arith.constant 0 : i32
    %c0_i32_0 = arith.constant 0 : i32
    return %arg0, %c0_i32, %0 : i32, i32, i32
  }
  func.func @transform_2(%arg0: i32, %arg1: i32) -> (i32, i32) {
    %c0_i32 = arith.constant 0 : i32
    %c0_i32_0 = arith.constant 0 : i32
    %c0_i32_1 = arith.constant 0 : i32
    return %c0_i32, %c0_i32_0 : i32, i32
  }
  func.func @transform_3(%arg0: i32, %arg1: i32) -> (i32, i32) {
    %c0_i32 = arith.constant 0 : i32
    %c0_i32_0 = arith.constant 0 : i32
    %c0_i32_1 = arith.constant 0 : i32
    return %c0_i32, %c0_i32_0 : i32, i32
  }
  func.func @transform_4(%arg0: i32, %arg1: i32) -> (i32, i32) {
    %c0_i32 = arith.constant 0 : i32
    %c0_i32_0 = arith.constant 0 : i32
    %c0_i32_1 = arith.constant 0 : i32
    return %c0_i32, %c0_i32_0 : i32, i32
  }
  func.func @transform_5(%arg0: i32, %arg1: i32) -> (i32, i32) {
    %c0_i32 = arith.constant 0 : i32
    %c0_i32_0 = arith.constant 0 : i32
    %c0_i32_1 = arith.constant 0 : i32
    return %c0_i32, %c0_i32_0 : i32, i32
  }
  func.func @transform_6(%arg0: i32, %arg1: i32) -> (i32, i32, i32) {
    %c0_i32 = arith.constant 0 : i32
    %c0_i32_0 = arith.constant 0 : i32
    return %arg0, %c0_i32, %arg1 : i32, i32, i32
  }
}

</mosaic_0001>

<llo_original>
// kernel: detect_wrapper_forward.1
$region0: #{detect_wrapper_forward.1}
  #allocation0 [shape = 'u32[]', space=smem, size = 0x4, offset = 0x4, fixed_abs, tag = 'smem constant byte address 0x4 - core index']
  #allocation1 [shape = 'u32[144,128]{1,0:T(1,128)}', space=vmem, size = 0x12000, scoped, tag = 'internal scratch']
  %s0 = inlined_call_operand.vmem [shape: bf16[2,8,768], index: 0, kind: input, shape index: {}, may-alias: {0,1}]
  %s1 = inlined_call_operand.vmem [shape: bf16[2,8,768], index: 1, kind: input, shape index: {}, may-alias: {0,1}]
  %s2 = inlined_call_operand.vmem [shape: bf16[32,72], index: 2, kind: input, shape index: {}]
  %s3 = inlined_call_operand.vmem [shape: f32[32,1], index: 3, kind: input, shape index: {}]
  %s4 = inlined_call_operand.vmem [shape: bf16[48,32], index: 4, kind: input, shape index: {}]
  %s5 = inlined_call_operand.vmem [shape: f32[48,1], index: 5, kind: input, shape index: {}]
  %s6 = inlined_call_operand.vmem [shape: bf16[2,48,384], index: 6, kind: output, shape index: {}]
  %s7 = sld [smem:[#allocation0]]
  $region57: #{detect_wrapper_forward.1} parent=0
    _
  %s9 = ssub.s32 1, %s7
  %s10 = scalar_select 0, %s9, %s7
  loop: start=0, step=1, limit=4
  $region2: #{detect_wrapper_forward.1} parent=0 // loop_pre_header
    _
  $region3: #{detect_wrapper_forward.1} parent=0 // loop_header
    %s12 = sphi 0, %s16
    %p13 = scmp.ge.s32.totalorder %s12, 4
    %s19 = sphi 0, %s31
    %s20 = sphi 0, %s27
    %s21 = sphi 0, %s19
    %s22 = sphi 0, %s20
    %s23 = sphi 0, %s21
    %s24 = sphi 0, %s22
    %s36 = sphi 0, %s38
    %s39 = sphi 0, %s36
    %s40 = sphi 0, %s39
    %s56 = sphi 0, %s40
    %s66 = sphi 0, %s68
    %s69 = sphi 0, %s66
    %s70 = sphi 0, %s69
    %s86 = sphi 0, %s70
    %s90 = sphi 0, %s90
    %s92 = sphi 0, %s90
    %s93 = sphi 0, %s92
    %s107 = sphi 0, %s93
    %s111 = sphi 0, %s111
    %s113 = sphi 0, %s111
    %s114 = sphi 0, %s113
    %s128 = sphi 0, %s114
    %s132 = sphi 0, %s132
    %s134 = sphi 0, %s132
    %s135 = sphi 0, %s134
    %s149 = sphi 0, %s135
    %s153 = sphi 0, %s153
    %s155 = sphi 0, %s153
    %s156 = sphi 0, %s155
    %s170 = sphi 0, %s156
    %s178 = sphi 0, %s180
    %s181 = sphi 0, %s178
    %s182 = sphi 0, %s181
    %s198 = sphi 0, %s182
  $region4: #{detect_wrapper_forward.1} parent=0 // loop_header_branch
    %15 = sbr.rel (%p13) target = $region8
  $region5: #{detect_wrapper_forward.1} parent=0 // loop_body
    %s17 = ssub.s32 %s12, 1
    %s18 = ssub.s32 %s12, 2
    %s25 = sadd.s32 1, %s20
    %p26 = scmp.ge.s32.totalorder %s25, 1
    %s27 = scalar_select %p26, 0, %s25
    %s28 = sadd.s32 1, %s19
    %s29 = scalar_select %p26, %s28, %s19
    %p30 = scmp.ge.s32.totalorder %s29, 2
    %s31 = scalar_select %p30, 0, %s29
    %s32 = ssub.s32 %s19, %s31
    %s33 = ssub.s32 %s20, %s27
    %s34 = sor.u32 %s32, %s33
    %p35 = scmp.eq.s32.totalorder %s34, 0
    %s37 = sadd.s32 %s36, 1
    %s38 = scalar_select %p35, %s36, %s37
    %p41 = pneg %p35
    %p42 = scmp.eq.s32.totalorder %s12, 1
    %p43 = por %p41, %p42
    %p44 = scmp.ne.s32.totalorder %s36, %s39
    %p45 = scmp.eq.s32.totalorder %s12, 0
    %p46 = por %p44, %p45
    %p47 = scmp.ne.s32.totalorder %s36, %s39
    %p48 = scmp.eq.s32.totalorder %s17, 1
    %p49 = por %p47, %p48
    %p50 = scmp.ne.s32.totalorder %s39, %s40
    %p51 = scmp.eq.s32.totalorder %s17, 0
    %p52 = por %p50, %p51
    %p53 = scmp.ne.s32.totalorder %s39, %s40
    %p54 = scmp.eq.s32.totalorder %s18, 1
    %p55 = por %p53, %p54
    %p57 = scmp.ne.s32.totalorder %s40, %s56
    %p58 = scmp.eq.s32.totalorder %s18, 0
    %p59 = por %p57, %p58
    %s60 = sadd.s32 %s20, 1
    %s61 = sadd.s32 %s27, 1
    %s62 = ssub.s32 %s19, %s31
    %s63 = ssub.s32 %s60, %s61
    %s64 = sor.u32 %s62, %s63
    %p65 = scmp.eq.s32.totalorder %s64, 0
    %s67 = sadd.s32 %s66, 1
    %s68 = scalar_select %p65, %s66, %s67
    %p71 = pneg %p65
    %p72 = scmp.eq.s32.totalorder %s12, 1
    %p73 = por %p71, %p72
    %p74 = scmp.ne.s32.totalorder %s66, %s69
    %p75 = scmp.eq.s32.totalorder %s12, 0
    %p76 = por %p74, %p75
    %p77 = scmp.ne.s32.totalorder %s66, %s69
    %p78 = scmp.eq.s32.totalorder %s17, 1
    %p79 = por %p77, %p78
    %p80 = scmp.ne.s32.totalorder %s69, %s70
    %p81 = scmp.eq.s32.totalorder %s17, 0
    %p82 = por %p80, %p81
    %p83 = scmp.ne.s32.totalorder %s69, %s70
    %p84 = scmp.eq.s32.totalorder %s18, 1
    %p85 = por %p83, %p84
    %p87 = scmp.ne.s32.totalorder %s70, %s86
    %p88 = scmp.eq.s32.totalorder %s18, 0
    %p89 = por %p87, %p88
    %s91 = sadd.s32 %s90, 1
    %p94 = scmp.eq.s32.totalorder %s12, 1
    %p95 = scmp.ne.s32.totalorder %s90, %s92
    %p96 = scmp.eq.s32.totalorder %s12, 0
    %p97 = por %p95, %p96
    %p98 = scmp.ne.s32.totalorder %s90, %s92
    %p99 = scmp.eq.s32.totalorder %s17, 1
    %p100 = por %p98, %p99
    %p101 = scmp.ne.s32.totalorder %s92, %s93
    %p102 = scmp.eq.s32.totalorder %s17, 0
    %p103 = por %p101, %p102
    %p104 = scmp.ne.s32.totalorder %s92, %s93
    %p105 = scmp.eq.s32.totalorder %s18, 1
    %p106 = por %p104, %p105
    %p108 = scmp.ne.s32.totalorder %s93, %s107
    %p109 = scmp.eq.s32.totalorder %s18, 0
    %p110 = por %p108, %p109
    %s112 = sadd.s32 %s111, 1
    %p115 = scmp.eq.s32.totalorder %s12, 1
    %p116 = scmp.ne.s32.totalorder %s111, %s113
    %p117 = scmp.eq.s32.totalorder %s12, 0
    %p118 = por %p116, %p117
    %p119 = scmp.ne.s32.totalorder %s111, %s113
    %p120 = scmp.eq.s32.totalorder %s17, 1
    %p121 = por %p119, %p120
    %p122 = scmp.ne.s32.totalorder %s113, %s114
    %p123 = scmp.eq.s32.totalorder %s17, 0
    %p124 = por %p122, %p123
    %p125 = scmp.ne.s32.totalorder %s113, %s114
    %p126 = scmp.eq.s32.totalorder %s18, 1
    %p127 = por %p125, %p126
    %p129 = scmp.ne.s32.totalorder %s114, %s128
    %p130 = scmp.eq.s32.totalorder %s18, 0
    %p131 = por %p129, %p130
    %s133 = sadd.s32 %s132, 1
    %p136 = scmp.eq.s32.totalorder %s12, 1
    %p137 = scmp.ne.s32.totalorder %s132, %s134
    %p138 = scmp.eq.s32.totalorder %s12, 0
    %p139 = por %p137, %p138
    %p140 = scmp.ne.s32.totalorder %s132, %s134
    %p141 = scmp.eq.s32.totalorder %s17, 1
    %p142 = por %p140, %p141
    %p143 = scmp.ne.s32.totalorder %s134, %s135
    %p144 = scmp.eq.s32.totalorder %s17, 0
    %p145 = por %p143, %p144
    %p146 = scmp.ne.s32.totalorder %s134, %s135
    %p147 = scmp.eq.s32.totalorder %s18, 1
    %p148 = por %p146, %p147
    %p150 = scmp.ne.s32.totalorder %s135, %s149
    %p151 = scmp.eq.s32.totalorder %s18, 0
    %p152 = por %p150, %p151
    %s154 = sadd.s32 %s153, 1
    %p157 = scmp.eq.s32.totalorder %s12, 1
    %p158 = scmp.ne.s32.totalorder %s153, %s155
    %p159 = scmp.eq.s32.totalorder %s12, 0
    %p160 = por %p158, %p159
    %p161 = scmp.ne.s32.totalorder %s153, %s155
    %p162 = scmp.eq.s32.totalorder %s17, 1
    %p163 = por %p161, %p162
    %p164 = scmp.ne.s32.totalorder %s155, %s156
    %p165 = scmp.eq.s32.totalorder %s17, 0
    %p166 = por %p164, %p165
    %p167 = scmp.ne.s32.totalorder %s155, %s156
    %p168 = scmp.eq.s32.totalorder %s18, 1
    %p169 = por %p167, %p168
    %p171 = scmp.ne.s32.totalorder %s156, %s170
    %p172 = scmp.eq.s32.totalorder %s18, 0
    %p173 = por %p171, %p172
    %s174 = ssub.s32 %s19, %s31
    %s175 = ssub.s32 %s20, %s27
    %s176 = sor.u32 %s174, %s175
    %p177 = scmp.eq.s32.totalorder %s176, 0
    %s179 = sadd.s32 %s178, 1
    %s180 = scalar_select %p177, %s178, %s179
    %p183 = pneg %p177
    %p184 = scmp.eq.s32.totalorder %s12, 1
    %p185 = por %p183, %p184
    %p186 = scmp.ne.s32.totalorder %s178, %s181
    %p187 = scmp.eq.s32.totalorder %s12, 0
    %p188 = por %p186, %p187
    %p189 = scmp.ne.s32.totalorder %s178, %s181
    %p190 = scmp.eq.s32.totalorder %s17, 1
    %p191 = por %p189, %p190
    %p192 = scmp.ne.s32.totalorder %s181, %s182
    %p193 = scmp.eq.s32.totalorder %s17, 0
    %p194 = por %p192, %p193
    %p195 = scmp.ne.s32.totalorder %s181, %s182
    %p196 = scmp.eq.s32.totalorder %s18, 1
    %p197 = por %p195, %p196
    %p199 = scmp.ne.s32.totalorder %s182, %s198
    %p200 = scmp.eq.s32.totalorder %s18, 0
    %p201 = por %p199, %p200
    %p202 = scmp.le.s32.totalorder 1, %s12
    %p203 = scmp.lt.s32.totalorder %s12, 3
    %p204 = pnand %p202, %p203
    %p205 = pneg %p204
    // Predicated region
    $region9: #{detect_wrapper_forward.1} parent=5 // pred_check
      _
    $region10: #{detect_wrapper_forward.1} parent=5 // pred_check_branch
      %207 = sbr.rel (%p204) target = $region12
    $region11: #{detect_wrapper_forward.1} parent=5 // pred_region
      %s208 = ssub.s32 %s12, 1
      // Predicated region
      $region13: #{detect_wrapper_forward.1} parent=11 // pred_check
        %p209 = pneg %p103
      $region14: #{detect_wrapper_forward.1} parent=11 // pred_check_branch
        %211 = sbr.rel (%p209) target = $region16
      $region15: #{detect_wrapper_forward.1} parent=11 // pred_region
        _
      $region16: #{detect_wrapper_forward.1} parent=11 // pred_fallthru
        _
      // Predicated region
      $region17: #{detect_wrapper_forward.1} parent=11 // pred_check
        %p212 = pneg %p124
      $region18: #{detect_wrapper_forward.1} parent=11 // pred_check_branch
        %214 = sbr.rel (%p212) target = $region20
      $region19: #{detect_wrapper_forward.1} parent=11 // pred_region
        _
      $region20: #{detect_wrapper_forward.1} parent=11 // pred_fallthru
        _
      // Predicated region
      $region21: #{detect_wrapper_forward.1} parent=11 // pred_check
        %p215 = pneg %p145
      $region22: #{detect_wrapper_forward.1} parent=11 // pred_check_branch
        %217 = sbr.rel (%p215) target = $region24
      $region23: #{detect_wrapper_forward.1} parent=11 // pred_region
        _
      $region24: #{detect_wrapper_forward.1} parent=11 // pred_fallthru
        _
      // Predicated region
      $region25: #{detect_wrapper_forward.1} parent=11 // pred_check
        %p218 = pneg %p166
      $region26: #{detect_wrapper_forward.1} parent=11 // pred_check_branch
        %220 = sbr.rel (%p218) target = $region28
      $region27: #{detect_wrapper_forward.1} parent=11 // pred_region
        _
      $region28: #{detect_wrapper_forward.1} parent=11 // pred_fallthru
        _
    $region12: #{detect_wrapper_forward.1} parent=5 // pred_fallthru
      _
    %p221 = scmp.lt.s32.totalorder %s12, 2
    // Predicated region
    $region29: #{detect_wrapper_forward.1} parent=5 // pred_check
      %p222 = pneg %p221
    $region30: #{detect_wrapper_forward.1} parent=5 // pred_check_branch
      %224 = sbr.rel (%p222) target = $region32
    $region31: #{detect_wrapper_forward.1} parent=5 // pred_region
      // Predicated region
      $region33: #{detect_wrapper_forward.1} parent=31 // pred_check
        %p225 = pneg %p46
      $region34: #{detect_wrapper_forward.1} parent=31 // pred_check_branch
        %227 = sbr.rel (%p225) target = $region36
      $region35: #{detect_wrapper_forward.1} parent=31 // pred_region
        %s228 = smul.u32 3, %s20
        %p229 = scmp.lt.s32.totalorder %s19, 1
        %s230 = scalar_select %p229, %s19, 1
        %p231 = scmp.lt.s32.totalorder %s228, 5
        %s232 = scalar_select %p231, %s228, 5
        %s233 = smul.addr %s230, 6
        %s234 = sadd.s32 %s232, %s233
        %s235 = smul.addr %s234, 4
        %s236 = scalar_lea.vmem %s0, %s235
        %s237 = smul.u32 3, %s20
      $region36: #{detect_wrapper_forward.1} parent=31 // pred_fallthru
        _
      // Predicated region
      $region37: #{detect_wrapper_forward.1} parent=31 // pred_check
        %p238 = pneg %p76
      $region38: #{detect_wrapper_forward.1} parent=31 // pred_check_branch
        %240 = sbr.rel (%p238) target = $region40
      $region39: #{detect_wrapper_forward.1} parent=31 // pred_region
        %s241 = sadd.s32 %s20, 1
        %s242 = smul.u32 3, %s241
        %p243 = scmp.lt.s32.totalorder %s19, 1
        %s244 = scalar_select %p243, %s19, 1
        %p245 = scmp.lt.s32.totalorder %s242, 5
        %s246 = scalar_select %p245, %s242, 5
        %s247 = smul.addr %s244, 6
        %s248 = sadd.s32 %s246, %s247
        %s249 = smul.addr %s248, 4
        %s250 = scalar_lea.vmem %s1, %s249
        %s251 = sadd.s32 %s20, 1
        %s252 = smul.u32 3, %s251
      $region40: #{detect_wrapper_forward.1} parent=31 // pred_fallthru
        _
    $region32: #{detect_wrapper_forward.1} parent=5 // pred_fallthru
      _
    %p253 = scmp.le.s32.totalorder 1, %s12
    %p254 = scmp.lt.s32.totalorder %s12, 3
    %p255 = pnand %p253, %p254
    %p256 = pneg %p255
    // Predicated region
    $region41: #{detect_wrapper_forward.1} parent=5 // pred_check
      _
    $region42: #{detect_wrapper_forward.1} parent=5 // pred_check_branch
      %258 = sbr.rel (%p255) target = $region44
    $region43: #{detect_wrapper_forward.1} parent=5 // pred_region
      %s259 = ssub.s32 %s12, 1
      %s260 = smul.u32 3, %s22
      %p261 = scmp.lt.s32.totalorder %s21, 1
      %s262 = scalar_select %p261, %s21, 1
      %p263 = scmp.lt.s32.totalorder %s260, 5
      %s264 = scalar_select %p263, %s260, 5
      %s265 = smul.addr %s262, 6
      %s266 = sadd.s32 %s264, %s265
      %s267 = smul.addr %s266, 4
      %s268 = scalar_lea.vmem %s0, %s267
      %p269 = pneg %p52
      %p270 = pneg %p49
      %s271 = sadd.s32 %s22, 1
      %s272 = smul.u32 3, %s271
      %p273 = scmp.lt.s32.totalorder %s21, 1
      %s274 = scalar_select %p273, %s21, 1
      %p275 = scmp.lt.s32.totalorder %s272, 5
      %s276 = scalar_select %p275, %s272, 5
      %s277 = smul.addr %s274, 6
      %s278 = sadd.s32 %s276, %s277
      %s279 = smul.addr %s278, 4
      %s280 = scalar_lea.vmem %s1, %s279
      %p281 = pneg %p82
      %p282 = pneg %p79
      %p283 = pneg %p103
      %p284 = pneg %p100
      %p285 = pneg %p124
      %p286 = pneg %p121
      %p287 = pneg %p145
      %p288 = pneg %p142
      %p289 = pneg %p166
      %p290 = pneg %p163
      %p291 = pneg %p194
      %p292 = pneg %p191
      %s293 = smul.u32 3, %s22
      %p294 = scmp.lt.s32.totalorder %s21, 1
      %s295 = scalar_select %p294, %s21, 1
      %p296 = scmp.lt.s32.totalorder %s293, 2
      %s297 = scalar_select %p296, %s293, 2
      %s298 = smul.addr %s295, 18
      %s299 = sadd.s32 %s297, %s298
      %s300 = smul.addr %s299, 4
      %s301 = scalar_lea.vmem %s6, %s300
      %s302 = smul.u32 3, %s22
      %p303 = scmp.lt.s32.totalorder %s21, 1
      %s304 = scalar_select %p303, %s21, 1
      %p305 = scmp.lt.s32.totalorder %s302, 5
      %s306 = scalar_select %p305, %s302, 5
      %s307 = smul.addr %s304, 6
      %s308 = sadd.s32 %s306, %s307
      %s309 = smul.addr %s308, 4
      %s310 = scalar_lea.vmem %s0, %s309
      %s311 = smul.u32 3, %s22
      %s312 = sadd.s32 %s22, 1
      %s313 = smul.u32 3, %s312
      %p314 = scmp.lt.s32.totalorder %s21, 1
      %s315 = scalar_select %p314, %s21, 1
      %p316 = scmp.lt.s32.totalorder %s313, 5
      %s317 = scalar_select %p316, %s313, 5
      %s318 = smul.addr %s315, 6
      %s319 = sadd.s32 %s317, %s318
      %s320 = smul.addr %s319, 4
      %s321 = scalar_lea.vmem %s1, %s320
      %s322 = sadd.s32 %s22, 1
      %s323 = smul.u32 3, %s322
      %s324 = smul.u32 3, %s22
      %p325 = scmp.lt.s32.totalorder %s21, 1
      %s326 = scalar_select %p325, %s21, 1
      %p327 = scmp.lt.s32.totalorder %s324, 2
      %s328 = scalar_select %p327, %s324, 2
      %s329 = smul.addr %s326, 18
      %s330 = sadd.s32 %s328, %s329
      %s331 = smul.addr %s330, 4
      %s332 = scalar_lea.vmem %s6, %s331
      %s333 = smul.u32 3, %s22
      %v335 = vld [vmem:[%s310] sm:$0xff]
      %v336 = vld [vmem:[%s310 + $0x8] sm:$0xf]
      %v337 = vld [vmem:[%s321] sm:$0xff]
      %v340 = vunpack.c.l.b16 %v335
      %v341 = vunpack.c.h.b16 %v335
      %v342 = vunpack.c.l.b16 %v336
      %v343 = vpack.c.b16 %v340, %v340
      %v344 = vpack.c.b16 %v341, %v341
      %v345 = vpack.c.b16 %v342, %v342
      %v347 = vrot.slane %v343, 4
      %v348 = vrot.slane %v344, 4
      %v349 = vrot.slane %v345, 4
      %v350 = vrot.slane %v337, 4
      %351 = vrot.lane.b32.xlu0 %v347, 127
      %v352 = vpop.permute.xlu0 %351
      %353 = vrot.lane.b32.xlu0 %v348, 127
      %v354 = vpop.permute.xlu0 %353
      %355 = vrot.lane.b32.xlu0 %v349, 127
      %v356 = vpop.permute.xlu0 %355
      %357 = vrot.lane.b32.xlu0 %v350, 127
      %v358 = vpop.permute.xlu0 %357
      %vm359 = vcmask 1039360
      %v360 = vsel %vm359, %v352, %v354
      %v361 = vsel %vm359, %v354, %v356
      %v362 = vsel %vm359, %v356, %v358
      %363 = vrot.lane.b32.xlu0 %v343, 126
      %v364 = vpop.permute.xlu0 %363
      %365 = vrot.lane.b32.xlu0 %v344, 126
      %v366 = vpop.permute.xlu0 %365
      %367 = vrot.lane.b32.xlu0 %v345, 126
      %v368 = vpop.permute.xlu0 %367
      %369 = vrot.lane.b32.xlu0 %v337, 126
      %v370 = vpop.permute.xlu0 %369
      %vm371 = vcmask 1031168
      %v372 = vsel %vm371, %v364, %v366
      %v373 = vsel %vm371, %v366, %v368
      %v374 = vsel %vm371, %v368, %v370
      %375 = vrot.lane.b32.xlu0 %v347, 110
      %v376 = vpop.permute.xlu0 %375
      %377 = vrot.lane.b32.xlu0 %v348, 110
      %v378 = vpop.permute.xlu0 %377
      %379 = vrot.lane.b32.xlu0 %v349, 110
      %v380 = vpop.permute.xlu0 %379
      %381 = vrot.lane.b32.xlu0 %v350, 110
      %v382 = vpop.permute.xlu0 %381
      %vm383 = vcmask 900096
      %v384 = vsel %vm383, %v376, %v378
      %v385 = vsel %vm383, %v378, %v380
      %v386 = vsel %vm383, %v380, %v382
      %387 = vrot.lane.b32.xlu0 %v343, 109
      %v388 = vpop.permute.xlu0 %387
      %389 = vrot.lane.b32.xlu0 %v344, 109
      %v390 = vpop.permute.xlu0 %389
      %391 = vrot.lane.b32.xlu0 %v345, 109
      %v392 = vpop.permute.xlu0 %391
      %393 = vrot.lane.b32.xlu0 %v337, 109
      %v394 = vpop.permute.xlu0 %393
      %vm395 = vcmask 891904
      %v396 = vsel %vm395, %v388, %v390
      %v397 = vsel %vm395, %v390, %v392
      %v398 = vsel %vm395, %v392, %v394
      %399 = vrot.lane.b32.xlu0 %v347, 108
      %v400 = vpop.permute.xlu0 %399
      %401 = vrot.lane.b32.xlu0 %v348, 108
      %v402 = vpop.permute.xlu0 %401
      %403 = vrot.lane.b32.xlu0 %v349, 108
      %v404 = vpop.permute.xlu0 %403
      %405 = vrot.lane.b32.xlu0 %v350, 108
      %v406 = vpop.permute.xlu0 %405
      %vm407 = vcmask 883712
      %v408 = vsel %vm407, %v400, %v402
      %v409 = vsel %vm407, %v402, %v404
      %v410 = vsel %vm407, %v404, %v406
      %411 = vrot.lane.b32.xlu0 %v343, 92
      %v412 = vpop.permute.xlu0 %411
      %413 = vrot.lane.b32.xlu0 %v344, 92
      %v414 = vpop.permute.xlu0 %413
      %415 = vrot.lane.b32.xlu0 %v345, 92
      %v416 = vpop.permute.xlu0 %415
      %417 = vrot.lane.b32.xlu0 %v337, 92
      %v418 = vpop.permute.xlu0 %417
      %vm419 = vcmask 752640
      %v420 = vsel %vm419, %v412, %v414
      %v421 = vsel %vm419, %v414, %v416
      %v422 = vsel %vm419, %v416, %v418
      %423 = vrot.lane.b32.xlu0 %v347, 91
      %v424 = vpop.permute.xlu0 %423
      %425 = vrot.lane.b32.xlu0 %v348, 91
      %v426 = vpop.permute.xlu0 %425
      %427 = vrot.lane.b32.xlu0 %v349, 91
      %v428 = vpop.permute.xlu0 %427
      %429 = vrot.lane.b32.xlu0 %v350, 91
      %v430 = vpop.permute.xlu0 %429
      %vm431 = vcmask 744448
      %v432 = vsel %vm431, %v424, %v426
      %v433 = vsel %vm431, %v426, %v428
      %v434 = vsel %vm431, %v428, %v430
      %435 = vrot.lane.b32.xlu0 %v343, 90
      %v436 = vpop.permute.xlu0 %435
      %437 = vrot.lane.b32.xlu0 %v344, 90
      %v438 = vpop.permute.xlu0 %437
      %439 = vrot.lane.b32.xlu0 %v345, 90
      %v440 = vpop.permute.xlu0 %439
      %441 = vrot.lane.b32.xlu0 %v337, 90
      %v442 = vpop.permute.xlu0 %441
      %vm443 = vcmask 736256
      %v444 = vsel %vm443, %v436, %v438
      %v445 = vsel %vm443, %v438, %v440
      %v446 = vsel %vm443, %v440, %v442
      %vm447 = vcmask 1043456
      %v450 = vsel %vm447, %v343, %v360
      %v454 = vsel %vm447, %v344, %v361
      %v458 = vsel %vm447, %v345, %v362
      %v462 = vsel %vm447, %v372, %v384
      %v466 = vsel %vm447, %v373, %v385
      %v470 = vsel %vm447, %v374, %v386
      %v474 = vsel %vm447, %v396, %v408
      %v478 = vsel %vm447, %v397, %v409
      %v482 = vsel %vm447, %v398, %v410
      %v486 = vsel %vm447, %v420, %v432
      %v490 = vsel %vm447, %v421, %v433
      %v494 = vsel %vm447, %v422, %v434
      %v496 = vld [vmem:[%s2] sm:$0xf]
      %v497 = vld [vmem:[%s2 + $0x4] sm:$0xf]
      %v498 = vld [vmem:[%s2 + $0x8] sm:$0xf]
      %v499 = vld [vmem:[%s2 + $0xc] sm:$0xf]
      %v500 = vld [vmem:[%s3] sm:$0xff]
      %v501 = vld [vmem:[%s3 + $0x8] sm:$0xff]
      %v502 = vld [vmem:[%s3 + $0x10] sm:$0xff]
      %v503 = vld [vmem:[%s3 + $0x18] sm:$0xff]
      %505 = vset.pattern.permute.xlu0 0
      %506 = vperm.xlu0 %505, %v500
      %v507 = vpop.permute.xlu0 %506
      %510 = vset.pattern.permute.xlu0 0
      %511 = vperm.xlu0 %510, %v501
      %v512 = vpop.permute.xlu0 %511
      %515 = vset.pattern.permute.xlu0 0
      %516 = vperm.xlu0 %515, %v502
      %v517 = vpop.permute.xlu0 %516
      %520 = vset.pattern.permute.xlu0 0
      %521 = vperm.xlu0 %520, %v503
      %v522 = vpop.permute.xlu0 %521
      %v528 = vunpack.c.l.b16 %v496
      %v529 = vunpack.c.l.b16 %v497
      %v530 = vunpack.c.l.b16 %v498
      %v531 = vunpack.c.l.b16 %v499
      %v532 = vpack.c.b16 %v529, %v528
      %v533 = vpack.c.b16 %v531, %v530
      %vm534 = vcmask 588800
      %v536 = vsel %vm534, %v532, 0
      %v539 = vsel %vm534, %v533, 0
      %v542 = vsel %vm447, %v444, 0
      %v545 = vsel %vm447, %v445, 0
      %v548 = vsel %vm447, %v446, 0
      %550 = vmatprep.subr.bf16.mxu0 0
      %551 = vmatpush1.bf16.msra.mxu0 0
      %552 = vmatprep.subr.bf16.mxu0 0
      %553 = vmatpush1.bf16.msra.mxu0 0
      %554 = vmatprep.subr.bf16.mxu0 0
      %555 = vmatpush1.bf16.msra.mxu0 0
      %556 = vmatprep.subr.bf16.mxu0 %v545
      %557 = vmatpush1.bf16.msra.mxu0 %v542
      %558 = vmatprep.subr.bf16.mxu0 %v490
      %559 = vmatpush1.bf16.msra.mxu0 %v486
      %560 = vmatprep.subr.bf16.mxu0 %v478
      %561 = vmatpush1.bf16.msra.mxu0 %v474
      %562 = vmatprep.subr.bf16.mxu0 %v466
      %563 = vmatpush1.bf16.msra.mxu0 %v462
      %564 = vmatprep.subr.bf16.mxu0 %v454
      %565 = vmatpush1.bf16.msra.mxu0 %v450
      %566 = vmatprep.subr.bf16.mxu0 0
      %567 = vmatpush2.bf16.msra.mxu0 0
      %568 = vmatprep.subr.bf16.mxu0 0
      %569 = vmatpush2.bf16.msra.mxu0 0
      %570 = vmatprep.subr.bf16.mxu0 0
      %571 = vmatpush2.bf16.msra.mxu0 0
      %572 = vmatprep.subr.bf16.mxu0 0
      %573 = vmatpush2.bf16.msra.mxu0 0
      %574 = vmatprep.subr.bf16.mxu0 0
      %575 = vmatpush2.bf16.msra.mxu0 0
      %576 = vmatprep.subr.bf16.mxu0 0
      %577 = vmatpush2.bf16.msra.mxu0 0
      %578 = vmatprep.subr.bf16.mxu0 0
      %579 = vmatpush2.bf16.msra.mxu0 0
      %580 = vmatprep.subr.bf16.mxu0 0
      %581 = vmatpush2.bf16.msra.mxu0 0
      %582 = vmatprep.mubr.bf16.mxu0 0
      %583 = vmatmul.mubr.bf16.gmra.mxu0 %v536
      %v584 = vpop.f32.mrf.mxu0
      %v585 = vadd.f32 %v507, %v584
      %v586 = vpop.f32.mrf.mxu0
      %v587 = vadd.f32 %v507, %v586
      %v588 = vpop.f32.mrf.mxu0
      %v589 = vadd.f32 %v512, %v588
      %v590 = vpop.f32.mrf.mxu0
      %v591 = vadd.f32 %v512, %v590
      %592 = vmatprep.mubr.bf16.mxu0 0
      %593 = vmatmul.mubr.bf16.gmra.mxu0 %v539
      %v594 = vpop.f32.mrf.mxu0
      %v595 = vadd.f32 %v517, %v594
      %v596 = vpop.f32.mrf.mxu0
      %v597 = vadd.f32 %v517, %v596
      %v598 = vpop.f32.mrf.mxu0
      %v599 = vadd.f32 %v522, %v598
      %v600 = vpop.f32.mrf.mxu0
      %v601 = vadd.f32 %v522, %v600
      %602 = vdwg.mxu0
      %603 = vmatprep.subr.bf16.mxu0 0
      %604 = vmatpush1.bf16.msra.mxu0 0
      %605 = vmatprep.subr.bf16.mxu0 0
      %606 = vmatpush1.bf16.msra.mxu0 0
      %607 = vmatprep.subr.bf16.mxu0 0
      %608 = vmatpush1.bf16.msra.mxu0 0
      %609 = vmatprep.subr.bf16.mxu0 0
      %610 = vmatpush1.bf16.msra.mxu0 %v548
      %611 = vmatprep.subr.bf16.mxu0 0
      %612 = vmatpush1.bf16.msra.mxu0 %v494
      %613 = vmatprep.subr.bf16.mxu0 0
      %614 = vmatpush1.bf16.msra.mxu0 %v482
      %615 = vmatprep.subr.bf16.mxu0 0
      %616 = vmatpush1.bf16.msra.mxu0 %v470
      %617 = vmatprep.subr.bf16.mxu0 0
      %618 = vmatpush1.bf16.msra.mxu0 %v458
      %619 = vmatprep.subr.bf16.mxu0 0
      %620 = vmatpush2.bf16.msra.mxu0 0
      %621 = vmatprep.subr.bf16.mxu0 0
      %622 = vmatpush2.bf16.msra.mxu0 0
      %623 = vmatprep.subr.bf16.mxu0 0
      %624 = vmatpush2.bf16.msra.mxu0 0
      %625 = vmatprep.subr.bf16.mxu0 0
      %626 = vmatpush2.bf16.msra.mxu0 0
      %627 = vmatprep.subr.bf16.mxu0 0
      %628 = vmatpush2.bf16.msra.mxu0 0
      %629 = vmatprep.subr.bf16.mxu0 0
      %630 = vmatpush2.bf16.msra.mxu0 0
      %631 = vmatprep.subr.bf16.mxu0 0
      %632 = vmatpush2.bf16.msra.mxu0 0
      %633 = vmatprep.subr.bf16.mxu0 0
      %634 = vmatpush2.bf16.msra.mxu0 0
      %635 = vmatprep.mubr.bf16.mxu0 0
      %636 = vmatmul.mubr.bf16.gmra.mxu0 %v536
      %v637 = vpop.f32.mrf.mxu0
      %v638 = vadd.f32 %v507, %v637
      %v639 = vpop.f32.mrf.mxu0
      %v640 = vpop.f32.mrf.mxu0
      %v641 = vadd.f32 %v512, %v640
      %v642 = vpop.f32.mrf.mxu0
      %643 = vmatprep.mubr.bf16.mxu0 0
      %644 = vmatmul.mubr.bf16.gmra.mxu0 %v539
      %v645 = vpop.f32.mrf.mxu0
      %v646 = vadd.f32 %v517, %v645
      %v647 = vpop.f32.mrf.mxu0
      %v648 = vpop.f32.mrf.mxu0
      %v649 = vadd.f32 %v522, %v648
      %v650 = vpop.f32.mrf.mxu0
      %651 = vdwg.mxu0
      %v652 = vmax.f32 %v585, 0.0
      %v653 = vmax.f32 %v587, 0.0
      %v654 = vmax.f32 %v638, 0.0
      %v655 = vmax.f32 %v589, 0.0
      %v656 = vmax.f32 %v591, 0.0
      %v657 = vmax.f32 %v641, 0.0
      %v658 = vmax.f32 %v595, 0.0
      %v659 = vmax.f32 %v597, 0.0
      %v660 = vmax.f32 %v646, 0.0
      %v661 = vmax.f32 %v599, 0.0
      %v662 = vmax.f32 %v601, 0.0
      %v663 = vmax.f32 %v649, 0.0
      %v664 = vld [vmem:[%s4] sm:$0xf]
      %v665 = vld [vmem:[%s4 + $0x4] sm:$0xf]
      %v666 = vld [vmem:[%s4 + $0x8] sm:$0xf]
      %v667 = vld [vmem:[%s4 + $0xc] sm:$0xf]
      %v668 = vld [vmem:[%s4 + $0x10] sm:$0xf]
      %v669 = vld [vmem:[%s4 + $0x14] sm:$0xf]
      %v670 = vpack.c.bf16 %v655, %v652
      %v671 = vpack.c.bf16 %v656, %v653
      %v672 = vpack.c.bf16 %v657, %v654
      %v673 = vpack.c.bf16 %v661, %v658
      %v674 = vpack.c.bf16 %v662, %v659
      %v675 = vpack.c.bf16 %v663, %v660
      %v676 = vld [vmem:[%s5] sm:$0xff]
      %v677 = vld [vmem:[%s5 + $0x8] sm:$0xff]
      %v678 = vld [vmem:[%s5 + $0x10] sm:$0xff]
      %v679 = vld [vmem:[%s5 + $0x18] sm:$0xff]
      %v680 = vld [vmem:[%s5 + $0x20] sm:$0xff]
      %v681 = vld [vmem:[%s5 + $0x28] sm:$0xff]
      %683 = vset.pattern.permute.xlu0 0
      %684 = vperm.xlu0 %683, %v676
      %v685 = vpop.permute.xlu0 %684
      %688 = vset.pattern.permute.xlu0 0
      %689 = vperm.xlu0 %688, %v677
      %v690 = vpop.permute.xlu0 %689
      %693 = vset.pattern.permute.xlu0 0
      %694 = vperm.xlu0 %693, %v678
      %v695 = vpop.permute.xlu0 %694
      %698 = vset.pattern.permute.xlu0 0
      %699 = vperm.xlu0 %698, %v679
      %v700 = vpop.permute.xlu0 %699
      %703 = vset.pattern.permute.xlu0 0
      %704 = vperm.xlu0 %703, %v680
      %v705 = vpop.permute.xlu0 %704
      %708 = vset.pattern.permute.xlu0 0
      %709 = vperm.xlu0 %708, %v681
      %v710 = vpop.permute.xlu0 %709
      %v718 = vunpack.c.l.b16 %v664
      %v719 = vunpack.c.l.b16 %v665
      %v720 = vunpack.c.l.b16 %v666
      %v721 = vunpack.c.l.b16 %v667
      %v722 = vunpack.c.l.b16 %v668
      %v723 = vunpack.c.l.b16 %v669
      %v724 = vpack.c.b16 %v719, %v718
      %v725 = vpack.c.b16 %v721, %v720
      %v726 = vpack.c.b16 %v723, %v722
      %vm727 = vcmask 261120
      %v729 = vsel %vm727, %v724, 0
      %v732 = vsel %vm727, %v725, 0
      %v735 = vsel %vm727, %v726, 0
      %737 = vmatprep.subr.bf16.mxu0 0
      %738 = vmatpush1.bf16.msra.mxu0 0
      %739 = vmatprep.subr.bf16.mxu0 0
      %740 = vmatpush1.bf16.msra.mxu0 0
      %741 = vmatprep.subr.bf16.mxu0 0
      %742 = vmatpush1.bf16.msra.mxu0 0
      %743 = vmatprep.subr.bf16.mxu0 0
      %744 = vmatpush1.bf16.msra.mxu0 0
      %745 = vmatprep.subr.bf16.mxu0 0
      %746 = vmatpush1.bf16.msra.mxu0 0
      %747 = vmatprep.subr.bf16.mxu0 0
      %748 = vmatpush1.bf16.msra.mxu0 0
      %749 = vmatprep.subr.bf16.mxu0 %v674
      %750 = vmatpush1.bf16.msra.mxu0 %v673
      %751 = vmatprep.subr.bf16.mxu0 %v671
      %752 = vmatpush1.bf16.msra.mxu0 %v670
      %753 = vmatprep.subr.bf16.mxu0 0
      %754 = vmatpush2.bf16.msra.mxu0 0
      %755 = vmatprep.subr.bf16.mxu0 0
      %756 = vmatpush2.bf16.msra.mxu0 0
      %757 = vmatprep.subr.bf16.mxu0 0
      %758 = vmatpush2.bf16.msra.mxu0 0
      %759 = vmatprep.subr.bf16.mxu0 0
      %760 = vmatpush2.bf16.msra.mxu0 0
      %761 = vmatprep.subr.bf16.mxu0 0
      %762 = vmatpush2.bf16.msra.mxu0 0
      %763 = vmatprep.subr.bf16.mxu0 0
      %764 = vmatpush2.bf16.msra.mxu0 0
      %765 = vmatprep.subr.bf16.mxu0 0
      %766 = vmatpush2.bf16.msra.mxu0 0
      %767 = vmatprep.subr.bf16.mxu0 0
      %768 = vmatpush2.bf16.msra.mxu0 0
      %769 = vmatprep.mubr.bf16.mxu0 0
      %770 = vmatmul.mubr.bf16.gmra.mxu0 %v729
      %v771 = vpop.f32.mrf.mxu0
      %v772 = vadd.f32 %v685, %v771
      %v773 = vpop.f32.mrf.mxu0
      %v774 = vadd.f32 %v685, %v773
      %v775 = vpop.f32.mrf.mxu0
      %v776 = vadd.f32 %v690, %v775
      %v777 = vpop.f32.mrf.mxu0
      %v778 = vadd.f32 %v690, %v777
      %779 = vmatprep.mubr.bf16.mxu0 0
      %780 = vmatmul.mubr.bf16.gmra.mxu0 %v732
      %v781 = vpop.f32.mrf.mxu0
      %v782 = vadd.f32 %v695, %v781
      %v783 = vpop.f32.mrf.mxu0
      %v784 = vadd.f32 %v695, %v783
      %v785 = vpop.f32.mrf.mxu0
      %v786 = vadd.f32 %v700, %v785
      %v787 = vpop.f32.mrf.mxu0
      %v788 = vadd.f32 %v700, %v787
      %789 = vmatprep.mubr.bf16.mxu0 0
      %790 = vmatmul.mubr.bf16.gmra.mxu0 %v735
      %v791 = vpop.f32.mrf.mxu0
      %v792 = vadd.f32 %v705, %v791
      %v793 = vpop.f32.mrf.mxu0
      %v794 = vadd.f32 %v705, %v793
      %v795 = vpop.f32.mrf.mxu0
      %v796 = vadd.f32 %v710, %v795
      %v797 = vpop.f32.mrf.mxu0
      %v798 = vadd.f32 %v710, %v797
      %799 = vdwg.mxu0
      %800 = vmatprep.subr.bf16.mxu0 0
      %801 = vmatpush1.bf16.msra.mxu0 0
      %802 = vmatprep.subr.bf16.mxu0 0
      %803 = vmatpush1.bf16.msra.mxu0 0
      %804 = vmatprep.subr.bf16.mxu0 0
      %805 = vmatpush1.bf16.msra.mxu0 0
      %806 = vmatprep.subr.bf16.mxu0 0
      %807 = vmatpush1.bf16.msra.mxu0 0
      %808 = vmatprep.subr.bf16.mxu0 0
      %809 = vmatpush1.bf16.msra.mxu0 0
      %810 = vmatprep.subr.bf16.mxu0 0
      %811 = vmatpush1.bf16.msra.mxu0 0
      %812 = vmatprep.subr.bf16.mxu0 0
      %813 = vmatpush1.bf16.msra.mxu0 %v675
      %814 = vmatprep.subr.bf16.mxu0 0
      %815 = vmatpush1.bf16.msra.mxu0 %v672
      %816 = vmatprep.subr.bf16.mxu0 0
      %817 = vmatpush2.bf16.msra.mxu0 0
      %818 = vmatprep.subr.bf16.mxu0 0
      %819 = vmatpush2.bf16.msra.mxu0 0
      %820 = vmatprep.subr.bf16.mxu0 0
      %821 = vmatpush2.bf16.msra.mxu0 0
      %822 = vmatprep.subr.bf16.mxu0 0
      %823 = vmatpush2.bf16.msra.mxu0 0
      %824 = vmatprep.subr.bf16.mxu0 0
      %825 = vmatpush2.bf16.msra.mxu0 0
      %826 = vmatprep.subr.bf16.mxu0 0
      %827 = vmatpush2.bf16.msra.mxu0 0
      %828 = vmatprep.subr.bf16.mxu0 0
      %829 = vmatpush2.bf16.msra.mxu0 0
      %830 = vmatprep.subr.bf16.mxu0 0
      %831 = vmatpush2.bf16.msra.mxu0 0
      %832 = vmatprep.mubr.bf16.mxu0 0
      %833 = vmatmul.mubr.bf16.gmra.mxu0 %v729
      %v834 = vpop.f32.mrf.mxu0
      %v835 = vadd.f32 %v685, %v834
      %v836 = vpop.f32.mrf.mxu0
      %v837 = vpop.f32.mrf.mxu0
      %v838 = vadd.f32 %v690, %v837
      %v839 = vpop.f32.mrf.mxu0
      %840 = vmatprep.mubr.bf16.mxu0 0
      %841 = vmatmul.mubr.bf16.gmra.mxu0 %v732
      %v842 = vpop.f32.mrf.mxu0
      %v843 = vadd.f32 %v695, %v842
      %v844 = vpop.f32.mrf.mxu0
      %v845 = vpop.f32.mrf.mxu0
      %v846 = vadd.f32 %v700, %v845
      %v847 = vpop.f32.mrf.mxu0
      %848 = vmatprep.mubr.bf16.mxu0 0
      %849 = vmatmul.mubr.bf16.gmra.mxu0 %v735
      %v850 = vpop.f32.mrf.mxu0
      %v851 = vadd.f32 %v705, %v850
      %v852 = vpop.f32.mrf.mxu0
      %v853 = vpop.f32.mrf.mxu0
      %v854 = vadd.f32 %v710, %v853
      %v855 = vpop.f32.mrf.mxu0
      %856 = vdwg.mxu0
      %v857 = vpack.c.bf16 %v776, %v772
      %v858 = vpack.c.bf16 %v778, %v774
      %v859 = vpack.c.bf16 %v838, %v835
      %v860 = vpack.c.bf16 %v786, %v782
      %v861 = vpack.c.bf16 %v788, %v784
      %v862 = vpack.c.bf16 %v846, %v843
      %v863 = vpack.c.bf16 %v796, %v792
      %v864 = vpack.c.bf16 %v798, %v794
      %v865 = vpack.c.bf16 %v854, %v851
      %v875 = vunpack.c.l.b16 %v857
      %v876 = vunpack.c.l.b16 %v858
      %v877 = vunpack.c.l.b16 %v859
      %v878 = vunpack.c.h.b16 %v857
      %v879 = vunpack.c.h.b16 %v858
      %v880 = vunpack.c.h.b16 %v859
      %v881 = vunpack.c.l.b16 %v860
      %v882 = vunpack.c.l.b16 %v861
      %v883 = vunpack.c.l.b16 %v862
      %v884 = vunpack.c.h.b16 %v860
      %v885 = vunpack.c.h.b16 %v861
      %v886 = vunpack.c.h.b16 %v862
      %v887 = vunpack.c.l.b16 %v863
      %v888 = vunpack.c.l.b16 %v864
      %v889 = vunpack.c.l.b16 %v865
      %v890 = vunpack.c.h.b16 %v863
      %v891 = vunpack.c.h.b16 %v864
      %v892 = vunpack.c.h.b16 %v865
      %v893 = vpack.c.b16 %v876, %v875
      %v894 = vpack.c.b16 %v877, %v877
      %v895 = vpack.c.b16 %v879, %v878
      %v896 = vpack.c.b16 %v880, %v880
      %v897 = vpack.c.b16 %v882, %v881
      %v898 = vpack.c.b16 %v883, %v883
      %v899 = vpack.c.b16 %v885, %v884
      %v900 = vpack.c.b16 %v886, %v886
      %v901 = vpack.c.b16 %v888, %v887
      %v902 = vpack.c.b16 %v889, %v889
      %v903 = vpack.c.b16 %v891, %v890
      %v904 = vpack.c.b16 %v892, %v892
      %917 = vst [vmem:[%s332] sm:$0xff] %v893
      %918 = vst [vmem:[%s332 + $0x8] sm:$0xf] %v894
      %919 = vst [vmem:[%s332 + $0xc] sm:$0xff] %v895
      %920 = vst [vmem:[%s332 + $0x14] sm:$0xf] %v896
      %921 = vst [vmem:[%s332 + $0x18] sm:$0xff] %v897
      %922 = vst [vmem:[%s332 + $0x20] sm:$0xf] %v898
      %923 = vst [vmem:[%s332 + $0x24] sm:$0xff] %v899
      %924 = vst [vmem:[%s332 + $0x2c] sm:$0xf] %v900
      %925 = vst [vmem:[%s332 + $0x30] sm:$0xff] %v901
      %926 = vst [vmem:[%s332 + $0x38] sm:$0xf] %v902
      %927 = vst [vmem:[%s332 + $0x3c] sm:$0xff] %v903
      %928 = vst [vmem:[%s332 + $0x44] sm:$0xf] %v904
      %s929 = smul.u32 3, %s22
      %p930 = scmp.lt.s32.totalorder %s21, 1
      %s931 = scalar_select %p930, %s21, 1
      %p932 = scmp.lt.s32.totalorder %s929, 2
      %s933 = scalar_select %p932, %s929, 2
      %s934 = smul.addr %s931, 18
      %s935 = sadd.s32 %s933, %s934
      %s936 = smul.addr %s935, 4
      %s937 = scalar_lea.vmem %s6, %s936
      // Predicated region
      $region45: #{detect_wrapper_forward.1} parent=43 // pred_check
        %p938 = pneg %p191
      $region46: #{detect_wrapper_forward.1} parent=43 // pred_check_branch
        %940 = sbr.rel (%p938) target = $region48
      $region47: #{detect_wrapper_forward.1} parent=43 // pred_region
        %s941 = smul.u32 3, %s22
      $region48: #{detect_wrapper_forward.1} parent=43 // pred_fallthru
        _
    $region44: #{detect_wrapper_forward.1} parent=5 // pred_fallthru
      _
    %p942 = scmp.le.s32.totalorder 2, %s12
    // Predicated region
    $region49: #{detect_wrapper_forward.1} parent=5 // pred_check
      %p943 = pneg %p942
    $region50: #{detect_wrapper_forward.1} parent=5 // pred_check_branch
      %945 = sbr.rel (%p943) target = $region52
    $region51: #{detect_wrapper_forward.1} parent=5 // pred_region
      %s946 = ssub.s32 %s12, 2
      // Predicated region
      $region53: #{detect_wrapper_forward.1} parent=51 // pred_check
        %p947 = pneg %p197
      $region54: #{detect_wrapper_forward.1} parent=51 // pred_check_branch
        %949 = sbr.rel (%p947) target = $region56
      $region55: #{detect_wrapper_forward.1} parent=51 // pred_region
        %s950 = smul.u32 3, %s24
        %p951 = scmp.lt.s32.totalorder %s23, 1
        %s952 = scalar_select %p951, %s23, 1
        %p953 = scmp.lt.s32.totalorder %s950, 2
        %s954 = scalar_select %p953, %s950, 2
        %s955 = smul.addr %s952, 18
        %s956 = sadd.s32 %s954, %s955
        %s957 = smul.addr %s956, 4
        %s958 = scalar_lea.vmem %s6, %s957
      $region56: #{detect_wrapper_forward.1} parent=51 // pred_fallthru
        _
    $region52: #{detect_wrapper_forward.1} parent=5 // pred_fallthru
      _
  $region6: #{detect_wrapper_forward.1} parent=0 // loop_footer
    %s16 = sadd.s32 1, %s12
  $region7: #{detect_wrapper_forward.1} parent=0 // loop_footer_branch
    %11 = sbr.rel target = $region3
  $region8: #{detect_wrapper_forward.1} parent=0 // loop_exit
    _

</llo_original>
